<compile_context>
chip_gen: v6e
topology: v6e:2x2x1
jax: 0.10.0
libtpu: 0.0.40
codegen_flags: <defaults>
</compile_context>

<pallas_src>
import functools

import jax
import jax.numpy as jnp
from jax import lax
from jax.experimental import pallas as pl
from jax.experimental.pallas import tpu as pltpu

C0 = 16          # c0 in the PyTorch script
BN_EPS = 1e-5


def _motif_2_4_kernel(N, C, H, W,
                      x_ref, dwk_ref, pw_ref, gamma_ref, beta_ref, o_ref):
    """Fused SeparableConv2d(3x3 dw + 1x1 pw) + BatchNorm2d(train) + ReLU.

    In-kernel layout (channel-major, lane-dense):
      rows  = channel c                      (C rows)
      lanes = images concatenated, j = n*HW + h*W + w   (N*HW lanes)

    x_ref:     (N*C, H*W)  input, row r = n*C + c, lane = h*W + w
    dwk_ref:   (C, 9)      depthwise 3x3 weights, tap-major (kh*3+kw)
    pw_ref:    (C, C)      pointwise weights, (c_out, c_in)
    gamma_ref: (C, 1)      BN scale
    beta_ref:  (C, 1)      BN shift
    o_ref:     (N*C, H*W)  output (minor dim multiple of 128 -> dense vst)
    """
    HW = H * W
    L = N * HW

    # ---- gather the images into one channel-major slab (lane concat at
    #      HW-aligned offsets: tile-aligned, no transpose).
    x = jnp.concatenate([x_ref[n * C:(n + 1) * C, :] for n in range(N)],
                        axis=1)                                      # (C, L)

    # ---- row-invariant boundary masks for the padding=1 conv, built once at
    #      (1, L) as float 0/1 and broadcast (frees ~7/8 of the old mask vregs).
    j = lax.broadcasted_iota(jnp.int32, (1, L), 1)
    jl = jnp.bitwise_and(j, HW - 1)            # position within its image (HW pow2)
    w_idx = jnp.bitwise_and(jl, W - 1)         # column (W pow2)
    m_h0 = (jl >= W).astype(jnp.float32)               # h >= 1
    m_h1 = (jl < (H - 1) * W).astype(jnp.float32)       # h <= H-2
    m_w0 = (w_idx != 0).astype(jnp.float32)              # w >= 1
    m_w1 = (w_idx != (W - 1)).astype(jnp.float32)        # w <= W-2
    tap_mask = {
        (-1, -1): m_h0 * m_w0, (-1, 0): m_h0, (-1, 1): m_h0 * m_w1,
        (0, -1): m_w0,         (0, 0): None,  (0, 1): m_w1,
        (1, -1): m_h1 * m_w0,  (1, 0): m_h1,  (1, 1): m_h1 * m_w1,
    }

    # ---- depthwise 3x3 (stride 1, pad 1): 9 rolled + masked products, summed
    #      as a balanced tree (shallow dependency chain, ILP for the VALUs).
    dwk = dwk_ref[...]                                   # (C, 9)
    prods = []
    for kh in range(3):
        for kw in range(3):
            dh, dw = kh - 1, kw - 1
            t = kh * 3 + kw
            wt = dwk[:, t:t + 1]                         # (C, 1)
            if dh == 0 and dw == 0:
                prods.append(x * wt)                     # center tap: no mask
                continue
            s = dh * W + dw                              # want x[:, j + s]
            xt = pltpu.roll(x, shift=(-s) % L, axis=1)   # xt[:, j] = x[:, (j+s) % L]
            prods.append((xt * wt) * tap_mask[(dh, dw)])
    while len(prods) > 1:                                # balanced-tree sum
        nxt = [prods[i] + prods[i + 1] for i in range(0, len(prods) - 1, 2)]
        if len(prods) % 2:
            nxt.append(prods[-1])
        prods = nxt
    acc = prods[0]                                       # (C, L)

    # ---- pointwise 1x1 conv: ONE (C,C)@(C,N*HW) matmul on the MXU.
    y = jnp.dot(pw_ref[...], acc, preferred_element_type=jnp.float32)   # (C, L)

    # ---- fused BatchNorm2d (batch stats, biased variance) + ReLU:
    #      single vectorized reduction, then one FMA + max at store time.
    inv_cnt = 1.0 / float(L)
    mean = jnp.sum(y, axis=1, keepdims=True) * inv_cnt                   # (C, 1)
    var = jnp.sum(y * y, axis=1, keepdims=True) * inv_cnt - mean * mean  # biased
    scale = gamma_ref[...] * lax.rsqrt(var + BN_EPS)     # rsqrt -> EUP slot
    shift = beta_ref[...] - mean * scale
    yhat = jnp.maximum(y * scale + shift, 0.0).astype(o_ref.dtype)       # (C, L)

    # ---- scatter back to the wrapper's (N*C, HW) layout: dense 256-wide stores.
    for n in range(N):
        o_ref[n * C:(n + 1) * C, :] = yhat[:, n * HW:(n + 1) * HW]
    # TODO(synk): BatchNorm running_mean/running_var buffer updates (training
    # side effect only) are not emulated; they do not affect the forward output.


def motif_2_4_forward(x_nchw, dw_weight, pw_weight, gamma, beta):
    """x_nchw: (N, C, H, W) float32, like the PyTorch module's input."""
    N, C, H, W = x_nchw.shape
    HW = H * W
    # Layout requirements of the lane-dense kernel (hold for this module: C=16, 16x16).
    assert C % 8 == 0, "C must be a multiple of 8 (sublane tile)"
    assert HW % 128 == 0, "H*W must be a multiple of 128 (lane tile)"
    assert HW & (HW - 1) == 0, "H*W must be a power of two (in-kernel mask math)"
    assert W & (W - 1) == 0, "W must be a power of two (in-kernel mask math)"

    x2 = x_nchw.reshape(N * C, HW)                 # free row-major reshape
    dwk = dw_weight.reshape(C, 9)                  # (C, 9), no per-image tiling
    pw = pw_weight.reshape(C, C)                   # (c_out, c_in)

    # Advisory cost hint so XLA schedules this tiny custom call tightly.
    flops = N * HW * C * (2 * 9 + 2 * C + 6)
    bytes_accessed = 4 * (2 * N * C * HW + C * 9 + C * C + 2 * C)

    out2 = pl.pallas_call(
        functools.partial(_motif_2_4_kernel, N, C, H, W),
        out_shape=jax.ShapeDtypeStruct((N * C, HW), x_nchw.dtype),
        cost_estimate=pl.CostEstimate(flops=flops, transcendentals=C,
                                      bytes_accessed=bytes_accessed),
        # no grid: the ~0.3 MiB working set fits VMEM on v5e/v6e/v7x; tiling
        # would only add per-step overhead at this latency-bound size.
    )(x2, dwk, pw, gamma.reshape(C, 1), beta.reshape(C, 1))

    return out2.reshape(N, C, H, W)                # free reshape back to NCHW


def motif_2_4_reference(x_nchw, dw_weight, pw_weight, gamma, beta):
    """Pure-JAX reference (mirrors the PyTorch forward) for a sanity check."""
    N, C, H, W = x_nchw.shape
    dn = ('NCHW', 'OIHW', 'NCHW')
    dw_out = lax.conv_general_dilated(
        x_nchw, dw_weight, window_strides=(1, 1),
        padding=((1, 1), (1, 1)), dimension_numbers=dn,
        feature_group_count=C)
    pw_out = lax.conv_general_dilated(
        dw_out, pw_weight, window_strides=(1, 1),
        padding='VALID', dimension_numbers=dn)
    mean = jnp.mean(pw_out, axis=(0, 2, 3), keepdims=True)
    var = jnp.mean((pw_out - mean) ** 2, axis=(0, 2, 3), keepdims=True)
    y = (pw_out - mean) / jnp.sqrt(var + BN_EPS)
    y = y * gamma.reshape(1, C, 1, 1) + beta.reshape(1, C, 1, 1)
    return jnp.maximum(y, 0.0)


if __name__ == "__main__":
    key = jax.random.PRNGKey(0)
    k_x, k_dw, k_pw = jax.random.split(key, 3)

    N, C, H, W = 2, C0, 16, 16

    x = jax.random.normal(k_x, (N, C, H, W), dtype=jnp.float32)

    # Deterministic parameter init (shapes match the PyTorch module):
    #   SeparableConv2d.conv1.weight:     (C, 1, 3, 3)  groups=C, bias=False
    #   SeparableConv2d.pointwise.weight: (C, C, 1, 1)  bias=False
    #   BatchNorm2d: weight=1, bias=0 (PyTorch defaults)
    dw_weight = 0.1 * jax.random.normal(k_dw, (C, 1, 3, 3), dtype=jnp.float32)
    pw_weight = 0.1 * jax.random.normal(k_pw, (C, C, 1, 1), dtype=jnp.float32)
    gamma = jnp.ones((C,), dtype=jnp.float32)
    beta = jnp.zeros((C,), dtype=jnp.float32)

    out = motif_2_4_forward(x, dw_weight, pw_weight, gamma, beta)
    out = jax.block_until_ready(out)

    ref = motif_2_4_reference(x, dw_weight, pw_weight, gamma, beta)
    assert out.shape == (N, C, H, W)
    assert jnp.allclose(out, ref, atol=1e-3, rtol=1e-3), \
        f"max abs err {jnp.max(jnp.abs(out - ref))}"

    print("KERNEL_OK")
</pallas_src>

<mosaic_0001>
module attributes {stable_mosaic.version = 11 : i64} {
  func.func @_motif_2_4_kernel(%arg0: memref<32x256xf32, #tpu.memory_space<vmem>>, %arg1: memref<16x9xf32, #tpu.memory_space<vmem>>, %arg2: memref<16x16xf32, #tpu.memory_space<vmem>>, %arg3: memref<16x1xf32, #tpu.memory_space<vmem>>, %arg4: memref<16x1xf32, #tpu.memory_space<vmem>>, %arg5: memref<32x256xf32, #tpu.memory_space<vmem>>) attributes {dimension_semantics = [], scalar_prefetch = 0 : i64, scratch_operands = 0 : i64, tpu.core_type = #tpu.core_type<tc>} {
    %c0 = arith.constant 0 : index
    %c0_0 = arith.constant 0 : index
    %0 = vector.load %arg0[%c0, %c0_0] : memref<32x256xf32, #tpu.memory_space<vmem>>, vector<16x256xf32>
    %c16 = arith.constant 16 : index
    %c0_1 = arith.constant 0 : index
    %1 = vector.load %arg0[%c16, %c0_1] : memref<32x256xf32, #tpu.memory_space<vmem>>, vector<16x256xf32>
    %2 = tpu.concatenate %0, %1 in 1 : vector<16x256xf32>, vector<16x256xf32> -> vector<16x512xf32>
    %3 = tpu.iota {dimensions = array<i32: 1>} : vector<1x512xi32>
    %c255_i32 = arith.constant 255 : i32
    %4 = vector.broadcast %c255_i32 : i32 to vector<1x512xi32>
    %5 = arith.andi %3, %4 : vector<1x512xi32>
    %c15_i32 = arith.constant 15 : i32
    %6 = vector.broadcast %c15_i32 : i32 to vector<1x512xi32>
    %7 = arith.andi %5, %6 : vector<1x512xi32>
    %c16_i32 = arith.constant 16 : i32
    %8 = vector.broadcast %c16_i32 : i32 to vector<1x512xi32>
    %9 = arith.cmpi sge, %5, %8 : vector<1x512xi32>
    %10 = arith.extui %9 : vector<1x512xi1> to vector<1x512xi32>
    %11 = arith.sitofp %10 : vector<1x512xi32> to vector<1x512xf32>
    %c240_i32 = arith.constant 240 : i32
    %12 = vector.broadcast %c240_i32 : i32 to vector<1x512xi32>
    %13 = arith.cmpi slt, %5, %12 : vector<1x512xi32>
    %14 = arith.extui %13 : vector<1x512xi1> to vector<1x512xi32>
    %15 = arith.sitofp %14 : vector<1x512xi32> to vector<1x512xf32>
    %c0_i32 = arith.constant 0 : i32
    %16 = vector.broadcast %c0_i32 : i32 to vector<1x512xi32>
    %17 = arith.cmpi ne, %7, %16 : vector<1x512xi32>
    %18 = arith.extui %17 : vector<1x512xi1> to vector<1x512xi32>
    %19 = arith.sitofp %18 : vector<1x512xi32> to vector<1x512xf32>
    %c15_i32_2 = arith.constant 15 : i32
    %20 = vector.broadcast %c15_i32_2 : i32 to vector<1x512xi32>
    %21 = arith.cmpi ne, %7, %20 : vector<1x512xi32>
    %22 = arith.extui %21 : vector<1x512xi1> to vector<1x512xi32>
    %23 = arith.sitofp %22 : vector<1x512xi32> to vector<1x512xf32>
    %24 = arith.mulf %11, %19 : vector<1x512xf32>
    %25 = arith.mulf %11, %23 : vector<1x512xf32>
    %26 = arith.mulf %15, %19 : vector<1x512xf32>
    %27 = arith.mulf %15, %23 : vector<1x512xf32>
    %c0_3 = arith.constant 0 : index
    %c0_4 = arith.constant 0 : index
    %28 = vector.load %arg1[%c0_3, %c0_4] : memref<16x9xf32, #tpu.memory_space<vmem>>, vector<16x9xf32>
    %29 = vector.extract_strided_slice %28 {offsets = [0, 0], sizes = [16, 1], strides = [1, 1]} : vector<16x9xf32> to vector<16x1xf32>
    %c17_i32 = arith.constant 17 : i32
    %30 = tpu.dynamic_rotate %2 by %c17_i32 dim 1 : vector<16x512xf32>, i32 -> vector<16x512xf32>
    %31 = vector.broadcast %29 : vector<16x1xf32> to vector<16x512xf32>
    %32 = arith.mulf %30, %31 : vector<16x512xf32>
    %33 = vector.broadcast %24 : vector<1x512xf32> to vector<16x512xf32>
    %34 = arith.mulf %32, %33 : vector<16x512xf32>
    %35 = vector.extract_strided_slice %28 {offsets = [0, 1], sizes = [16, 1], strides = [1, 1]} : vector<16x9xf32> to vector<16x1xf32>
    %c16_i32_5 = arith.constant 16 : i32
    %36 = tpu.dynamic_rotate %2 by %c16_i32_5 dim 1 : vector<16x512xf32>, i32 -> vector<16x512xf32>
    %37 = vector.broadcast %35 : vector<16x1xf32> to vector<16x512xf32>
    %38 = arith.mulf %36, %37 : vector<16x512xf32>
    %39 = vector.broadcast %11 : vector<1x512xf32> to vector<16x512xf32>
    %40 = arith.mulf %38, %39 : vector<16x512xf32>
    %41 = vector.extract_strided_slice %28 {offsets = [0, 2], sizes = [16, 1], strides = [1, 1]} : vector<16x9xf32> to vector<16x1xf32>
    %c15_i32_6 = arith.constant 15 : i32
    %42 = tpu.dynamic_rotate %2 by %c15_i32_6 dim 1 : vector<16x512xf32>, i32 -> vector<16x512xf32>
    %43 = vector.broadcast %41 : vector<16x1xf32> to vector<16x512xf32>
    %44 = arith.mulf %42, %43 : vector<16x512xf32>
    %45 = vector.broadcast %25 : vector<1x512xf32> to vector<16x512xf32>
    %46 = arith.mulf %44, %45 : vector<16x512xf32>
    %47 = vector.extract_strided_slice %28 {offsets = [0, 3], sizes = [16, 1], strides = [1, 1]} : vector<16x9xf32> to vector<16x1xf32>
    %c1_i32 = arith.constant 1 : i32
    %48 = tpu.dynamic_rotate %2 by %c1_i32 dim 1 : vector<16x512xf32>, i32 -> vector<16x512xf32>
    %49 = vector.broadcast %47 : vector<16x1xf32> to vector<16x512xf32>
    %50 = arith.mulf %48, %49 : vector<16x512xf32>
    %51 = vector.broadcast %19 : vector<1x512xf32> to vector<16x512xf32>
    %52 = arith.mulf %50, %51 : vector<16x512xf32>
    %53 = vector.extract_strided_slice %28 {offsets = [0, 4], sizes = [16, 1], strides = [1, 1]} : vector<16x9xf32> to vector<16x1xf32>
    %54 = vector.broadcast %53 : vector<16x1xf32> to vector<16x512xf32>
    %55 = arith.mulf %2, %54 : vector<16x512xf32>
    %56 = vector.extract_strided_slice %28 {offsets = [0, 5], sizes = [16, 1], strides = [1, 1]} : vector<16x9xf32> to vector<16x1xf32>
    %c511_i32 = arith.constant 511 : i32
    %57 = tpu.dynamic_rotate %2 by %c511_i32 dim 1 : vector<16x512xf32>, i32 -> vector<16x512xf32>
    %58 = vector.broadcast %56 : vector<16x1xf32> to vector<16x512xf32>
    %59 = arith.mulf %57, %58 : vector<16x512xf32>
    %60 = vector.broadcast %23 : vector<1x512xf32> to vector<16x512xf32>
    %61 = arith.mulf %59, %60 : vector<16x512xf32>
    %62 = vector.extract_strided_slice %28 {offsets = [0, 6], sizes = [16, 1], strides = [1, 1]} : vector<16x9xf32> to vector<16x1xf32>
    %c497_i32 = arith.constant 497 : i32
    %63 = tpu.dynamic_rotate %2 by %c497_i32 dim 1 : vector<16x512xf32>, i32 -> vector<16x512xf32>
    %64 = vector.broadcast %62 : vector<16x1xf32> to vector<16x512xf32>
    %65 = arith.mulf %63, %64 : vector<16x512xf32>
    %66 = vector.broadcast %26 : vector<1x512xf32> to vector<16x512xf32>
    %67 = arith.mulf %65, %66 : vector<16x512xf32>
    %68 = vector.extract_strided_slice %28 {offsets = [0, 7], sizes = [16, 1], strides = [1, 1]} : vector<16x9xf32> to vector<16x1xf32>
    %c496_i32 = arith.constant 496 : i32
    %69 = tpu.dynamic_rotate %2 by %c496_i32 dim 1 : vector<16x512xf32>, i32 -> vector<16x512xf32>
    %70 = vector.broadcast %68 : vector<16x1xf32> to vector<16x512xf32>
    %71 = arith.mulf %69, %70 : vector<16x512xf32>
    %72 = vector.broadcast %15 : vector<1x512xf32> to vector<16x512xf32>
    %73 = arith.mulf %71, %72 : vector<16x512xf32>
    %74 = vector.extract_strided_slice %28 {offsets = [0, 8], sizes = [16, 1], strides = [1, 1]} : vector<16x9xf32> to vector<16x1xf32>
    %c495_i32 = arith.constant 495 : i32
    %75 = tpu.dynamic_rotate %2 by %c495_i32 dim 1 : vector<16x512xf32>, i32 -> vector<16x512xf32>
    %76 = vector.broadcast %74 : vector<16x1xf32> to vector<16x512xf32>
    %77 = arith.mulf %75, %76 : vector<16x512xf32>
    %78 = vector.broadcast %27 : vector<1x512xf32> to vector<16x512xf32>
    %79 = arith.mulf %77, %78 : vector<16x512xf32>
    %80 = arith.addf %34, %40 : vector<16x512xf32>
    %81 = arith.addf %46, %52 : vector<16x512xf32>
    %82 = arith.addf %55, %61 : vector<16x512xf32>
    %83 = arith.addf %67, %73 : vector<16x512xf32>
    %84 = arith.addf %80, %81 : vector<16x512xf32>
    %85 = arith.addf %82, %83 : vector<16x512xf32>
    %86 = arith.addf %84, %85 : vector<16x512xf32>
    %87 = arith.addf %86, %79 : vector<16x512xf32>
    %c0_7 = arith.constant 0 : index
    %c0_8 = arith.constant 0 : index
    %88 = vector.load %arg2[%c0_7, %c0_8] : memref<16x16xf32, #tpu.memory_space<vmem>>, vector<16x16xf32>
    %cst = arith.constant dense<0.000000e+00> : vector<16x512xf32>
    %89 = tpu.matmul %88, %87, %cst {dimension_numbers = #tpu.dot_dimension_numbers<[1], [0], [0], [1], [0, 0, 1, 1], [], []>} : vector<16x16xf32>, vector<16x512xf32>, vector<16x512xf32> -> vector<16x512xf32>
    %cst_9 = arith.constant dense<0.000000e+00> : vector<16xf32>
    %90 = vector.multi_reduction <add>, %89, %cst_9 [1] : vector<16x512xf32> to vector<16xf32>
    %91 = vector.shape_cast %90 : vector<16xf32> to vector<16x1xf32>
    %cst_10 = arith.constant 0.001953125 : f32
    %92 = vector.broadcast %cst_10 : f32 to vector<16x1xf32>
    %93 = arith.mulf %91, %92 : vector<16x1xf32>
    %94 = arith.mulf %89, %89 : vector<16x512xf32>
    %cst_11 = arith.constant dense<0.000000e+00> : vector<16xf32>
    %95 = vector.multi_reduction <add>, %94, %cst_11 [1] : vector<16x512xf32> to vector<16xf32>
    %96 = vector.shape_cast %95 : vector<16xf32> to vector<16x1xf32>
    %cst_12 = arith.constant 0.001953125 : f32
    %97 = vector.broadcast %cst_12 : f32 to vector<16x1xf32>
    %98 = arith.mulf %96, %97 : vector<16x1xf32>
    %99 = arith.mulf %93, %93 : vector<16x1xf32>
    %100 = arith.subf %98, %99 : vector<16x1xf32>
    %c0_13 = arith.constant 0 : index
    %c0_14 = arith.constant 0 : index
    %101 = vector.load %arg3[%c0_13, %c0_14] : memref<16x1xf32, #tpu.memory_space<vmem>>, vector<16x1xf32>
    %cst_15 = arith.constant 9.99999974E-6 : f32
    %102 = vector.broadcast %cst_15 : f32 to vector<16x1xf32>
    %103 = arith.addf %100, %102 : vector<16x1xf32>
    %104 = math.rsqrt %103 : vector<16x1xf32>
    %105 = arith.mulf %101, %104 : vector<16x1xf32>
    %c0_16 = arith.constant 0 : index
    %c0_17 = arith.constant 0 : index
    %106 = vector.load %arg4[%c0_16, %c0_17] : memref<16x1xf32, #tpu.memory_space<vmem>>, vector<16x1xf32>
    %107 = arith.mulf %93, %105 : vector<16x1xf32>
    %108 = arith.subf %106, %107 : vector<16x1xf32>
    %109 = vector.broadcast %105 : vector<16x1xf32> to vector<16x512xf32>
    %110 = arith.mulf %89, %109 : vector<16x512xf32>
    %111 = vector.broadcast %108 : vector<16x1xf32> to vector<16x512xf32>
    %112 = arith.addf %110, %111 : vector<16x512xf32>
    %cst_18 = arith.constant 0.000000e+00 : f32
    %113 = vector.broadcast %cst_18 : f32 to vector<16x512xf32>
    %114 = arith.maximumf %112, %113 : vector<16x512xf32>
    %115 = vector.extract_strided_slice %114 {offsets = [0, 0], sizes = [16, 256], strides = [1, 1]} : vector<16x512xf32> to vector<16x256xf32>
    %c0_19 = arith.constant 0 : index
    %c0_20 = arith.constant 0 : index
    %116 = vector.load %arg5[%c0_19, %c0_20] : memref<32x256xf32, #tpu.memory_space<vmem>>, vector<16x256xf32>
    tpu.vector_store %arg5[%c0_19, %c0_20], %115 {strides = array<i32>} : memref<32x256xf32, #tpu.memory_space<vmem>>, vector<16x256xf32>,
    %117 = vector.extract_strided_slice %114 {offsets = [0, 256], sizes = [16, 256], strides = [1, 1]} : vector<16x512xf32> to vector<16x256xf32>
    %c16_21 = arith.constant 16 : index
    %c0_22 = arith.constant 0 : index
    %118 = vector.load %arg5[%c16_21, %c0_22] : memref<32x256xf32, #tpu.memory_space<vmem>>, vector<16x256xf32>
    tpu.vector_store %arg5[%c16_21, %c0_22], %117 {strides = array<i32>} : memref<32x256xf32, #tpu.memory_space<vmem>>, vector<16x256xf32>,
    return
  }
}

</mosaic_0001>

<llo_original>
// kernel: tpu_custom_call.1
$region0: #{tpu_custom_call.1}
  #allocation0 [shape = 'u32[]', space=smem, size = 0x4, offset = 0x4, fixed_abs, tag = 'smem constant byte address 0x4 - core index']
  #allocation1 [shape = 'u32[144,128]{1,0:T(1,128)}', space=vmem, size = 0x12000, scoped, tag = 'internal scratch']
  %s0 = inlined_call_operand.hbm [shape: f32[32,256], index: 0, kind: input, shape index: {}]
  %s1 = inlined_call_operand.vmem [shape: f32[16,9], index: 1, kind: input, shape index: {}]
  %s2 = inlined_call_operand.vmem [shape: f32[16,16], index: 2, kind: input, shape index: {}]
  %s3 = inlined_call_operand.vmem [shape: f32[16,1], index: 3, kind: input, shape index: {}]
  %s4 = inlined_call_operand.vmem [shape: f32[16,1], index: 4, kind: input, shape index: {}]
  %s5 = inlined_call_operand.hbm [shape: f32[32,256], index: 5, kind: output, shape index: {}]
  %s6 = sld [smem:[#allocation0]]
  $region34: #{tpu_custom_call.1} parent=0
    _
  %s8 = ssub.s32 1, %s6
  %s9 = scalar_select 0, %s8, %s6
  $region1: #{tpu_custom_call.1} parent=0
    #allocation2 [shape = 'u8[32768]{0}', space=vmem, size = 0x8000, scoped, tag = 'input window, operand 0, single buffered']
    #allocation3 [shape = 's32[1]{0}', space=sflag, size = 0x4, scoped, tag = 'scoped memory for tpu_custom_call.1']
    #allocation4 [shape = 's32[1]{0}', space=sflag, size = 0x4, scoped, tag = 'scoped memory for tpu_custom_call.1']
    #allocation5 [shape = 'u8[32768]{0}', space=vmem, size = 0x8000, scoped, tag = 'output window, operand 0, single buffered']
    %10 = vsyncpa [#allocation3], 0
    %11 = vsyncpa [#allocation4], 0
    // Predicated region
    $region2: #{tpu_custom_call.1} parent=1 // pred_check
      _
    $region3: #{tpu_custom_call.1} parent=1 // pred_check_branch
      %13 = sbr.rel (0) target = $region5
    $region4: #{tpu_custom_call.1} parent=1 // pred_region
      %s15 = ssub.s32 1024, 1024
      %16 = vsyncadd [#allocation3], %s15
      %s17 = sshll.u32 [#allocation2], 4
      %s18 = int_to_ptr.vmem [resolvable:$true] %s17
      %23 = dma.hbm_to_vmem [thread:$0]  %s0, 1024, %s18, [#allocation3], 256, 256, 16
    $region5: #{tpu_custom_call.1} parent=1 // pred_fallthru
      _
    // Predicated region
    $region6: #{tpu_custom_call.1} parent=1 // pred_check
      _
    $region7: #{tpu_custom_call.1} parent=1 // pred_check_branch
      %25 = sbr.rel (0) target = $region9
    $region8: #{tpu_custom_call.1} parent=1 // pred_region
      _
    $region9: #{tpu_custom_call.1} parent=1 // pred_fallthru
      _
    // Predicated region
    $region10: #{tpu_custom_call.1} parent=1 // pred_check
      _
    $region11: #{tpu_custom_call.1} parent=1 // pred_check_branch
      %27 = sbr.rel (0) target = $region13
    $region12: #{tpu_custom_call.1} parent=1 // pred_region
      _
    $region13: #{tpu_custom_call.1} parent=1 // pred_fallthru
      _
    // Predicated region
    $region14: #{tpu_custom_call.1} parent=1 // pred_check
      _
    $region15: #{tpu_custom_call.1} parent=1 // pred_check_branch
      %29 = sbr.rel (0) target = $region17
    $region16: #{tpu_custom_call.1} parent=1 // pred_region
      _
    $region17: #{tpu_custom_call.1} parent=1 // pred_fallthru
      _
    // Predicated region
    $region18: #{tpu_custom_call.1} parent=1 // pred_check
      _
    $region19: #{tpu_custom_call.1} parent=1 // pred_check_branch
      %31 = sbr.rel (0) target = $region21
    $region20: #{tpu_custom_call.1} parent=1 // pred_region
      _
    $region21: #{tpu_custom_call.1} parent=1 // pred_fallthru
      _
    // Predicated region
    $region22: #{tpu_custom_call.1} parent=1 // pred_check
      _
    $region23: #{tpu_custom_call.1} parent=1 // pred_check_branch
      %33 = sbr.rel (0) target = $region25
    $region24: #{tpu_custom_call.1} parent=1 // pred_region
      %34 = dma.done [#allocation3], 1024
    $region25: #{tpu_custom_call.1} parent=1 // pred_fallthru
      _
    %v35 = vld [vmem:[#allocation2] sm:$0xff]
    %v36 = vld [vmem:[#allocation2 + $0x8] sm:$0xff]
    %v37 = vld [vmem:[#allocation2 + $0x10] sm:$0xff]
    %v38 = vld [vmem:[#allocation2 + $0x18] sm:$0xff]
    %v39 = vld [vmem:[#allocation2 + $0x20] sm:$0xff]
    %v40 = vld [vmem:[#allocation2 + $0x28] sm:$0xff]
    %v41 = vld [vmem:[#allocation2 + $0x30] sm:$0xff]
    %v42 = vld [vmem:[#allocation2 + $0x38] sm:$0xff]
    %v43 = vlaneseq
    %v44 = vand.u32 %v43, 127
    %v45 = vadd.s32 %v44, 128
    %v46 = vadd.s32 %v44, 256
    %v47 = vadd.s32 %v44, 384
    %v48 = vand.u32 %v44, 255
    %v49 = vand.u32 %v45, 255
    %v50 = vand.u32 %v46, 255
    %v51 = vand.u32 %v47, 255
    %v52 = vand.u32 %v48, 15
    %v53 = vand.u32 %v49, 15
    %v54 = vand.u32 %v50, 15
    %v55 = vand.u32 %v51, 15
    %vm56 = vcmp.ge.s32.totalorder %v48, 16
    %vm57 = vcmp.ge.s32.totalorder %v49, 16
    %vm58 = vcmp.ge.s32.totalorder %v50, 16
    %vm59 = vcmp.ge.s32.totalorder %v51, 16
    %v60 = vsel %vm56, 1, 0
    %v61 = vsel %vm57, 1, 0
    %v62 = vsel %vm58, 1, 0
    %v63 = vsel %vm59, 1, 0
    %v64 = vcvt.s32.f32 %v60
    %v65 = vcvt.s32.f32 %v61
    %v66 = vcvt.s32.f32 %v62
    %v67 = vcvt.s32.f32 %v63
    %vm68 = vcmp.lt.s32.totalorder %v48, 240
    %vm69 = vcmp.lt.s32.totalorder %v49, 240
    %vm70 = vcmp.lt.s32.totalorder %v50, 240
    %vm71 = vcmp.lt.s32.totalorder %v51, 240
    %v72 = vsel %vm68, 1, 0
    %v73 = vsel %vm69, 1, 0
    %v74 = vsel %vm70, 1, 0
    %v75 = vsel %vm71, 1, 0
    %v76 = vcvt.s32.f32 %v72
    %v77 = vcvt.s32.f32 %v73
    %v78 = vcvt.s32.f32 %v74
    %v79 = vcvt.s32.f32 %v75
    %vm80 = vcmp.ne.s32.totalorder %v52, 0
    %vm81 = vcmp.ne.s32.totalorder %v53, 0
    %vm82 = vcmp.ne.s32.totalorder %v54, 0
    %vm83 = vcmp.ne.s32.totalorder %v55, 0
    %v84 = vsel %vm80, 1, 0
    %v85 = vsel %vm81, 1, 0
    %v86 = vsel %vm82, 1, 0
    %v87 = vsel %vm83, 1, 0
    %v88 = vcvt.s32.f32 %v84
    %v89 = vcvt.s32.f32 %v85
    %v90 = vcvt.s32.f32 %v86
    %v91 = vcvt.s32.f32 %v87
    %vm92 = vcmp.ne.s32.totalorder %v52, 15
    %vm93 = vcmp.ne.s32.totalorder %v53, 15
    %vm94 = vcmp.ne.s32.totalorder %v54, 15
    %vm95 = vcmp.ne.s32.totalorder %v55, 15
    %v96 = vsel %vm92, 1, 0
    %v97 = vsel %vm93, 1, 0
    %v98 = vsel %vm94, 1, 0
    %v99 = vsel %vm95, 1, 0
    %v100 = vcvt.s32.f32 %v96
    %v101 = vcvt.s32.f32 %v97
    %v102 = vcvt.s32.f32 %v98
    %v103 = vcvt.s32.f32 %v99
    %v104 = vmul.f32 %v64, %v88
    %v105 = vmul.f32 %v65, %v89
    %v106 = vmul.f32 %v66, %v90
    %v107 = vmul.f32 %v67, %v91
    %v108 = vmul.f32 %v64, %v100
    %v109 = vmul.f32 %v65, %v101
    %v110 = vmul.f32 %v66, %v102
    %v111 = vmul.f32 %v67, %v103
    %v112 = vmul.f32 %v76, %v88
    %v113 = vmul.f32 %v77, %v89
    %v114 = vmul.f32 %v78, %v90
    %v115 = vmul.f32 %v79, %v91
    %v116 = vmul.f32 %v76, %v100
    %v117 = vmul.f32 %v77, %v101
    %v118 = vmul.f32 %v78, %v102
    %v119 = vmul.f32 %v79, %v103
    %v120 = vld [vmem:[%s1] sm:$0xff]
    %v121 = vld [vmem:[%s1 + $0x8] sm:$0xff]
    %122 = vrot.lane.b32.xlu0 %v35, 17
    %v123 = vpop.permute.xlu0 %122
    %124 = vrot.lane.b32.xlu0 %v37, 17
    %v125 = vpop.permute.xlu0 %124
    %126 = vrot.lane.b32.xlu0 %v36, 17
    %v127 = vpop.permute.xlu0 %126
    %128 = vrot.lane.b32.xlu0 %v38, 17
    %v129 = vpop.permute.xlu0 %128
    %130 = vrot.lane.b32.xlu0 %v39, 17
    %v131 = vpop.permute.xlu0 %130
    %132 = vrot.lane.b32.xlu0 %v41, 17
    %v133 = vpop.permute.xlu0 %132
    %134 = vrot.lane.b32.xlu0 %v40, 17
    %v135 = vpop.permute.xlu0 %134
    %136 = vrot.lane.b32.xlu0 %v42, 17
    %v137 = vpop.permute.xlu0 %136
    %vm138 = vcmp.lt.s32.totalorder %v44, 17
    %v139 = vsel %vm138, %v131, %v135
    %v140 = vsel %vm138, %v133, %v137
    %v141 = vsel %vm138, %v127, %v131
    %v142 = vsel %vm138, %v129, %v133
    %v143 = vsel %vm138, %v123, %v127
    %v144 = vsel %vm138, %v125, %v129
    %v145 = vsel %vm138, %v135, %v123
    %v146 = vsel %vm138, %v137, %v125
    %148 = vset.pattern.permute.xlu0 0
    %149 = vperm.xlu0 %148, %v120
    %v150 = vpop.permute.xlu0 %149
    %153 = vset.pattern.permute.xlu0 0
    %154 = vperm.xlu0 %153, %v121
    %v155 = vpop.permute.xlu0 %154
    %v157 = vmul.f32 %v145, %v150
    %v158 = vmul.f32 %v143, %v150
    %v159 = vmul.f32 %v141, %v150
    %v160 = vmul.f32 %v139, %v150
    %v161 = vmul.f32 %v146, %v155
    %v162 = vmul.f32 %v144, %v155
    %v163 = vmul.f32 %v142, %v155
    %v164 = vmul.f32 %v140, %v155
    %v165 = vmul.f32 %v157, %v104
    %v166 = vmul.f32 %v158, %v105
    %v167 = vmul.f32 %v159, %v106
    %v168 = vmul.f32 %v160, %v107
    %v169 = vmul.f32 %v161, %v104
    %v170 = vmul.f32 %v162, %v105
    %v171 = vmul.f32 %v163, %v106
    %v172 = vmul.f32 %v164, %v107
    %173 = vrot.lane.b32.xlu0 %v35, 16
    %v174 = vpop.permute.xlu0 %173
    %175 = vrot.lane.b32.xlu0 %v37, 16
    %v176 = vpop.permute.xlu0 %175
    %177 = vrot.lane.b32.xlu0 %v36, 16
    %v178 = vpop.permute.xlu0 %177
    %179 = vrot.lane.b32.xlu0 %v38, 16
    %v180 = vpop.permute.xlu0 %179
    %181 = vrot.lane.b32.xlu0 %v39, 16
    %v182 = vpop.permute.xlu0 %181
    %183 = vrot.lane.b32.xlu0 %v41, 16
    %v184 = vpop.permute.xlu0 %183
    %185 = vrot.lane.b32.xlu0 %v40, 16
    %v186 = vpop.permute.xlu0 %185
    %187 = vrot.lane.b32.xlu0 %v42, 16
    %v188 = vpop.permute.xlu0 %187
    %vm189 = vcmp.lt.s32.totalorder %v44, 16
    %v190 = vsel %vm189, %v182, %v186
    %v191 = vsel %vm189, %v184, %v188
    %v192 = vsel %vm189, %v178, %v182
    %v193 = vsel %vm189, %v180, %v184
    %v194 = vsel %vm189, %v174, %v178
    %v195 = vsel %vm189, %v176, %v180
    %v196 = vsel %vm189, %v186, %v174
    %v197 = vsel %vm189, %v188, %v176
    %198 = vset.pattern.permute.xlu0 1
    %199 = vperm.xlu0 %198, %v120
    %v200 = vpop.permute.xlu0 %199
    %202 = vset.pattern.permute.xlu0 1
    %203 = vperm.xlu0 %202, %v121
    %v204 = vpop.permute.xlu0 %203
    %v206 = vmul.f32 %v196, %v200
    %v207 = vmul.f32 %v194, %v200
    %v208 = vmul.f32 %v192, %v200
    %v209 = vmul.f32 %v190, %v200
    %v210 = vmul.f32 %v197, %v204
    %v211 = vmul.f32 %v195, %v204
    %v212 = vmul.f32 %v193, %v204
    %v213 = vmul.f32 %v191, %v204
    %v214 = vmul.f32 %v206, %v64
    %v215 = vmul.f32 %v207, %v65
    %v216 = vmul.f32 %v208, %v66
    %v217 = vmul.f32 %v209, %v67
    %v218 = vmul.f32 %v210, %v64
    %v219 = vmul.f32 %v211, %v65
    %v220 = vmul.f32 %v212, %v66
    %v221 = vmul.f32 %v213, %v67
    %222 = vrot.lane.b32.xlu0 %v35, 15
    %v223 = vpop.permute.xlu0 %222
    %224 = vrot.lane.b32.xlu0 %v37, 15
    %v225 = vpop.permute.xlu0 %224
    %226 = vrot.lane.b32.xlu0 %v36, 15
    %v227 = vpop.permute.xlu0 %226
    %228 = vrot.lane.b32.xlu0 %v38, 15
    %v229 = vpop.permute.xlu0 %228
    %230 = vrot.lane.b32.xlu0 %v39, 15
    %v231 = vpop.permute.xlu0 %230
    %232 = vrot.lane.b32.xlu0 %v41, 15
    %v233 = vpop.permute.xlu0 %232
    %234 = vrot.lane.b32.xlu0 %v40, 15
    %v235 = vpop.permute.xlu0 %234
    %236 = vrot.lane.b32.xlu0 %v42, 15
    %v237 = vpop.permute.xlu0 %236
    %vm238 = vcmp.lt.s32.totalorder %v44, 15
    %v239 = vsel %vm238, %v231, %v235
    %v240 = vsel %vm238, %v233, %v237
    %v241 = vsel %vm238, %v227, %v231
    %v242 = vsel %vm238, %v229, %v233
    %v243 = vsel %vm238, %v223, %v227
    %v244 = vsel %vm238, %v225, %v229
    %v245 = vsel %vm238, %v235, %v223
    %v246 = vsel %vm238, %v237, %v225
    %247 = vset.pattern.permute.xlu0 2
    %248 = vperm.xlu0 %247, %v120
    %v249 = vpop.permute.xlu0 %248
    %251 = vset.pattern.permute.xlu0 2
    %252 = vperm.xlu0 %251, %v121
    %v253 = vpop.permute.xlu0 %252
    %v255 = vmul.f32 %v245, %v249
    %v256 = vmul.f32 %v243, %v249
    %v257 = vmul.f32 %v241, %v249
    %v258 = vmul.f32 %v239, %v249
    %v259 = vmul.f32 %v246, %v253
    %v260 = vmul.f32 %v244, %v253
    %v261 = vmul.f32 %v242, %v253
    %v262 = vmul.f32 %v240, %v253
    %v263 = vmul.f32 %v255, %v108
    %v264 = vmul.f32 %v256, %v109
    %v265 = vmul.f32 %v257, %v110
    %v266 = vmul.f32 %v258, %v111
    %v267 = vmul.f32 %v259, %v108
    %v268 = vmul.f32 %v260, %v109
    %v269 = vmul.f32 %v261, %v110
    %v270 = vmul.f32 %v262, %v111
    %271 = vrot.lane.b32.xlu0 %v35, 1
    %v272 = vpop.permute.xlu0 %271
    %273 = vrot.lane.b32.xlu0 %v37, 1
    %v274 = vpop.permute.xlu0 %273
    %275 = vrot.lane.b32.xlu0 %v36, 1
    %v276 = vpop.permute.xlu0 %275
    %277 = vrot.lane.b32.xlu0 %v38, 1
    %v278 = vpop.permute.xlu0 %277
    %279 = vrot.lane.b32.xlu0 %v39, 1
    %v280 = vpop.permute.xlu0 %279
    %281 = vrot.lane.b32.xlu0 %v41, 1
    %v282 = vpop.permute.xlu0 %281
    %283 = vrot.lane.b32.xlu0 %v40, 1
    %v284 = vpop.permute.xlu0 %283
    %285 = vrot.lane.b32.xlu0 %v42, 1
    %v286 = vpop.permute.xlu0 %285
    %vm287 = vcmp.lt.s32.totalorder %v44, 1
    %v288 = vsel %vm287, %v280, %v284
    %v289 = vsel %vm287, %v282, %v286
    %v290 = vsel %vm287, %v276, %v280
    %v291 = vsel %vm287, %v278, %v282
    %v292 = vsel %vm287, %v272, %v276
    %v293 = vsel %vm287, %v274, %v278
    %v294 = vsel %vm287, %v284, %v272
    %v295 = vsel %vm287, %v286, %v274
    %296 = vset.pattern.permute.xlu0 3
    %297 = vperm.xlu0 %296, %v120
    %v298 = vpop.permute.xlu0 %297
    %300 = vset.pattern.permute.xlu0 3
    %301 = vperm.xlu0 %300, %v121
    %v302 = vpop.permute.xlu0 %301
    %v304 = vmul.f32 %v294, %v298
    %v305 = vmul.f32 %v292, %v298
    %v306 = vmul.f32 %v290, %v298
    %v307 = vmul.f32 %v288, %v298
    %v308 = vmul.f32 %v295, %v302
    %v309 = vmul.f32 %v293, %v302
    %v310 = vmul.f32 %v291, %v302
    %v311 = vmul.f32 %v289, %v302
    %v312 = vmul.f32 %v304, %v88
    %v313 = vmul.f32 %v305, %v89
    %v314 = vmul.f32 %v306, %v90
    %v315 = vmul.f32 %v307, %v91
    %v316 = vmul.f32 %v308, %v88
    %v317 = vmul.f32 %v309, %v89
    %v318 = vmul.f32 %v310, %v90
    %v319 = vmul.f32 %v311, %v91
    %320 = vset.pattern.permute.xlu0 4
    %321 = vperm.xlu0 %320, %v120
    %v322 = vpop.permute.xlu0 %321
    %324 = vset.pattern.permute.xlu0 4
    %325 = vperm.xlu0 %324, %v121
    %v326 = vpop.permute.xlu0 %325
    %v328 = vmul.f32 %v35, %v322
    %v329 = vmul.f32 %v36, %v322
    %v330 = vmul.f32 %v39, %v322
    %v331 = vmul.f32 %v40, %v322
    %v332 = vmul.f32 %v37, %v326
    %v333 = vmul.f32 %v38, %v326
    %v334 = vmul.f32 %v41, %v326
    %v335 = vmul.f32 %v42, %v326
    %336 = vrot.lane.b32.xlu0 %v35, 127
    %v337 = vpop.permute.xlu0 %336
    %338 = vrot.lane.b32.xlu0 %v37, 127
    %v339 = vpop.permute.xlu0 %338
    %340 = vrot.lane.b32.xlu0 %v36, 127
    %v341 = vpop.permute.xlu0 %340
    %342 = vrot.lane.b32.xlu0 %v38, 127
    %v343 = vpop.permute.xlu0 %342
    %344 = vrot.lane.b32.xlu0 %v39, 127
    %v345 = vpop.permute.xlu0 %344
    %346 = vrot.lane.b32.xlu0 %v41, 127
    %v347 = vpop.permute.xlu0 %346
    %348 = vrot.lane.b32.xlu0 %v40, 127
    %v349 = vpop.permute.xlu0 %348
    %350 = vrot.lane.b32.xlu0 %v42, 127
    %v351 = vpop.permute.xlu0 %350
    %vm352 = vcmp.lt.s32.totalorder %v44, 127
    %v353 = vsel %vm352, %v345, %v349
    %v354 = vsel %vm352, %v347, %v351
    %v355 = vsel %vm352, %v341, %v345
    %v356 = vsel %vm352, %v343, %v347
    %v357 = vsel %vm352, %v337, %v341
    %v358 = vsel %vm352, %v339, %v343
    %v359 = vsel %vm352, %v349, %v337
    %v360 = vsel %vm352, %v351, %v339
    %361 = vset.pattern.permute.xlu0 5
    %362 = vperm.xlu0 %361, %v120
    %v363 = vpop.permute.xlu0 %362
    %365 = vset.pattern.permute.xlu0 5
    %366 = vperm.xlu0 %365, %v121
    %v367 = vpop.permute.xlu0 %366
    %v369 = vmul.f32 %v357, %v363
    %v370 = vmul.f32 %v355, %v363
    %v371 = vmul.f32 %v353, %v363
    %v372 = vmul.f32 %v359, %v363
    %v373 = vmul.f32 %v358, %v367
    %v374 = vmul.f32 %v356, %v367
    %v375 = vmul.f32 %v354, %v367
    %v376 = vmul.f32 %v360, %v367
    %v377 = vmul.f32 %v369, %v100
    %v378 = vmul.f32 %v370, %v101
    %v379 = vmul.f32 %v371, %v102
    %v380 = vmul.f32 %v372, %v103
    %v381 = vmul.f32 %v373, %v100
    %v382 = vmul.f32 %v374, %v101
    %v383 = vmul.f32 %v375, %v102
    %v384 = vmul.f32 %v376, %v103
    %385 = vrot.lane.b32.xlu0 %v35, 113
    %v386 = vpop.permute.xlu0 %385
    %387 = vrot.lane.b32.xlu0 %v37, 113
    %v388 = vpop.permute.xlu0 %387
    %389 = vrot.lane.b32.xlu0 %v36, 113
    %v390 = vpop.permute.xlu0 %389
    %391 = vrot.lane.b32.xlu0 %v38, 113
    %v392 = vpop.permute.xlu0 %391
    %393 = vrot.lane.b32.xlu0 %v39, 113
    %v394 = vpop.permute.xlu0 %393
    %395 = vrot.lane.b32.xlu0 %v41, 113
    %v396 = vpop.permute.xlu0 %395
    %397 = vrot.lane.b32.xlu0 %v40, 113
    %v398 = vpop.permute.xlu0 %397
    %399 = vrot.lane.b32.xlu0 %v42, 113
    %v400 = vpop.permute.xlu0 %399
    %vm401 = vcmp.lt.s32.totalorder %v44, 113
    %v402 = vsel %vm401, %v394, %v398
    %v403 = vsel %vm401, %v396, %v400
    %v404 = vsel %vm401, %v390, %v394
    %v405 = vsel %vm401, %v392, %v396
    %v406 = vsel %vm401, %v386, %v390
    %v407 = vsel %vm401, %v388, %v392
    %v408 = vsel %vm401, %v398, %v386
    %v409 = vsel %vm401, %v400, %v388
    %410 = vset.pattern.permute.xlu0 6
    %411 = vperm.xlu0 %410, %v120
    %v412 = vpop.permute.xlu0 %411
    %414 = vset.pattern.permute.xlu0 6
    %415 = vperm.xlu0 %414, %v121
    %v416 = vpop.permute.xlu0 %415
    %v418 = vmul.f32 %v406, %v412
    %v419 = vmul.f32 %v404, %v412
    %v420 = vmul.f32 %v402, %v412
    %v421 = vmul.f32 %v408, %v412
    %v422 = vmul.f32 %v407, %v416
    %v423 = vmul.f32 %v405, %v416
    %v424 = vmul.f32 %v403, %v416
    %v425 = vmul.f32 %v409, %v416
    %v426 = vmul.f32 %v418, %v112
    %v427 = vmul.f32 %v419, %v113
    %v428 = vmul.f32 %v420, %v114
    %v429 = vmul.f32 %v421, %v115
    %v430 = vmul.f32 %v422, %v112
    %v431 = vmul.f32 %v423, %v113
    %v432 = vmul.f32 %v424, %v114
    %v433 = vmul.f32 %v425, %v115
    %434 = vrot.lane.b32.xlu0 %v35, 112
    %v435 = vpop.permute.xlu0 %434
    %436 = vrot.lane.b32.xlu0 %v37, 112
    %v437 = vpop.permute.xlu0 %436
    %438 = vrot.lane.b32.xlu0 %v36, 112
    %v439 = vpop.permute.xlu0 %438
    %440 = vrot.lane.b32.xlu0 %v38, 112
    %v441 = vpop.permute.xlu0 %440
    %442 = vrot.lane.b32.xlu0 %v39, 112
    %v443 = vpop.permute.xlu0 %442
    %444 = vrot.lane.b32.xlu0 %v41, 112
    %v445 = vpop.permute.xlu0 %444
    %446 = vrot.lane.b32.xlu0 %v40, 112
    %v447 = vpop.permute.xlu0 %446
    %448 = vrot.lane.b32.xlu0 %v42, 112
    %v449 = vpop.permute.xlu0 %448
    %vm450 = vcmp.lt.s32.totalorder %v44, 112
    %v451 = vsel %vm450, %v443, %v447
    %v452 = vsel %vm450, %v445, %v449
    %v453 = vsel %vm450, %v439, %v443
    %v454 = vsel %vm450, %v441, %v445
    %v455 = vsel %vm450, %v435, %v439
    %v456 = vsel %vm450, %v437, %v441
    %v457 = vsel %vm450, %v447, %v435
    %v458 = vsel %vm450, %v449, %v437
    %459 = vset.pattern.permute.xlu0 7
    %460 = vperm.xlu0 %459, %v120
    %v461 = vpop.permute.xlu0 %460
    %463 = vset.pattern.permute.xlu0 7
    %464 = vperm.xlu0 %463, %v121
    %v465 = vpop.permute.xlu0 %464
    %v467 = vmul.f32 %v455, %v461
    %v468 = vmul.f32 %v453, %v461
    %v469 = vmul.f32 %v451, %v461
    %v470 = vmul.f32 %v457, %v461
    %v471 = vmul.f32 %v456, %v465
    %v472 = vmul.f32 %v454, %v465
    %v473 = vmul.f32 %v452, %v465
    %v474 = vmul.f32 %v458, %v465
    %v475 = vmul.f32 %v467, %v76
    %v476 = vmul.f32 %v468, %v77
    %v477 = vmul.f32 %v469, %v78
    %v478 = vmul.f32 %v470, %v79
    %v479 = vmul.f32 %v471, %v76
    %v480 = vmul.f32 %v472, %v77
    %v481 = vmul.f32 %v473, %v78
    %v482 = vmul.f32 %v474, %v79
    %483 = vrot.lane.b32.xlu0 %v35, 111
    %v484 = vpop.permute.xlu0 %483
    %485 = vrot.lane.b32.xlu0 %v37, 111
    %v486 = vpop.permute.xlu0 %485
    %487 = vrot.lane.b32.xlu0 %v36, 111
    %v488 = vpop.permute.xlu0 %487
    %489 = vrot.lane.b32.xlu0 %v38, 111
    %v490 = vpop.permute.xlu0 %489
    %491 = vrot.lane.b32.xlu0 %v39, 111
    %v492 = vpop.permute.xlu0 %491
    %493 = vrot.lane.b32.xlu0 %v41, 111
    %v494 = vpop.permute.xlu0 %493
    %495 = vrot.lane.b32.xlu0 %v40, 111
    %v496 = vpop.permute.xlu0 %495
    %497 = vrot.lane.b32.xlu0 %v42, 111
    %v498 = vpop.permute.xlu0 %497
    %vm499 = vcmp.lt.s32.totalorder %v44, 111
    %v500 = vsel %vm499, %v492, %v496
    %v501 = vsel %vm499, %v494, %v498
    %v502 = vsel %vm499, %v488, %v492
    %v503 = vsel %vm499, %v490, %v494
    %v504 = vsel %vm499, %v484, %v488
    %v505 = vsel %vm499, %v486, %v490
    %v506 = vsel %vm499, %v496, %v484
    %v507 = vsel %vm499, %v498, %v486
    %508 = vset.pattern.permute.xlu0 8
    %509 = vperm.xlu0 %508, %v120
    %v510 = vpop.permute.xlu0 %509
    %512 = vset.pattern.permute.xlu0 8
    %513 = vperm.xlu0 %512, %v121
    %v514 = vpop.permute.xlu0 %513
    %v516 = vmul.f32 %v504, %v510
    %v517 = vmul.f32 %v502, %v510
    %v518 = vmul.f32 %v500, %v510
    %v519 = vmul.f32 %v506, %v510
    %v520 = vmul.f32 %v505, %v514
    %v521 = vmul.f32 %v503, %v514
    %v522 = vmul.f32 %v501, %v514
    %v523 = vmul.f32 %v507, %v514
    %v524 = vmul.f32 %v516, %v116
    %v525 = vmul.f32 %v517, %v117
    %v526 = vmul.f32 %v518, %v118
    %v527 = vmul.f32 %v519, %v119
    %v528 = vmul.f32 %v520, %v116
    %v529 = vmul.f32 %v521, %v117
    %v530 = vmul.f32 %v522, %v118
    %v531 = vmul.f32 %v523, %v119
    %v532 = vadd.f32 %v165, %v214
    %v533 = vadd.f32 %v166, %v215
    %v534 = vadd.f32 %v167, %v216
    %v535 = vadd.f32 %v168, %v217
    %v536 = vadd.f32 %v169, %v218
    %v537 = vadd.f32 %v170, %v219
    %v538 = vadd.f32 %v171, %v220
    %v539 = vadd.f32 %v172, %v221
    %v540 = vadd.f32 %v263, %v312
    %v541 = vadd.f32 %v264, %v313
    %v542 = vadd.f32 %v265, %v314
    %v543 = vadd.f32 %v266, %v315
    %v544 = vadd.f32 %v267, %v316
    %v545 = vadd.f32 %v268, %v317
    %v546 = vadd.f32 %v269, %v318
    %v547 = vadd.f32 %v270, %v319
    %v548 = vadd.f32 %v328, %v377
    %v549 = vadd.f32 %v329, %v378
    %v550 = vadd.f32 %v330, %v379
    %v551 = vadd.f32 %v331, %v380
    %v552 = vadd.f32 %v332, %v381
    %v553 = vadd.f32 %v333, %v382
    %v554 = vadd.f32 %v334, %v383
    %v555 = vadd.f32 %v335, %v384
    %v556 = vadd.f32 %v426, %v475
    %v557 = vadd.f32 %v427, %v476
    %v558 = vadd.f32 %v428, %v477
    %v559 = vadd.f32 %v429, %v478
    %v560 = vadd.f32 %v430, %v479
    %v561 = vadd.f32 %v431, %v480
    %v562 = vadd.f32 %v432, %v481
    %v563 = vadd.f32 %v433, %v482
    %v564 = vadd.f32 %v532, %v540
    %v565 = vadd.f32 %v533, %v541
    %v566 = vadd.f32 %v534, %v542
    %v567 = vadd.f32 %v535, %v543
    %v568 = vadd.f32 %v536, %v544
    %v569 = vadd.f32 %v537, %v545
    %v570 = vadd.f32 %v538, %v546
    %v571 = vadd.f32 %v539, %v547
    %v572 = vadd.f32 %v548, %v556
    %v573 = vadd.f32 %v549, %v557
    %v574 = vadd.f32 %v550, %v558
    %v575 = vadd.f32 %v551, %v559
    %v576 = vadd.f32 %v552, %v560
    %v577 = vadd.f32 %v553, %v561
    %v578 = vadd.f32 %v554, %v562
    %v579 = vadd.f32 %v555, %v563
    %v580 = vadd.f32 %v564, %v572
    %v581 = vadd.f32 %v565, %v573
    %v582 = vadd.f32 %v566, %v574
    %v583 = vadd.f32 %v567, %v575
    %v584 = vadd.f32 %v568, %v576
    %v585 = vadd.f32 %v569, %v577
    %v586 = vadd.f32 %v570, %v578
    %v587 = vadd.f32 %v571, %v579
    %v588 = vadd.f32 %v580, %v524
    %v589 = vadd.f32 %v581, %v525
    %v590 = vadd.f32 %v582, %v526
    %v591 = vadd.f32 %v583, %v527
    %v592 = vadd.f32 %v584, %v528
    %v593 = vadd.f32 %v585, %v529
    %v594 = vadd.f32 %v586, %v530
    %v595 = vadd.f32 %v587, %v531
    %v596 = vld [vmem:[%s2] sm:$0xff]
    %v597 = vld [vmem:[%s2 + $0x8] sm:$0xff]
    %vm598 = vcmask 130048
    %v600 = vsel %vm598, %v596, 0
    %v603 = vsel %vm598, %v597, 0
    %605 = vmatprep.subr.mxu0 0.0
    %606 = vmatpush1.msra.mxu0 0.0
    %607 = vmatprep.subr.mxu0 0.0
    %608 = vmatpush1.msra.mxu0 0.0
    %609 = vmatprep.subr.mxu0 0.0
    %610 = vmatpush1.msra.mxu0 0.0
    %611 = vmatprep.subr.mxu0 0.0
    %612 = vmatpush1.msra.mxu0 0.0
    %613 = vmatprep.subr.mxu0 0.0
    %614 = vmatpush1.msra.mxu0 0.0
    %615 = vmatprep.subr.mxu0 0.0
    %616 = vmatpush1.msra.mxu0 0.0
    %617 = vmatprep.subr.mxu0 0.0
    %618 = vmatpush1.msra.mxu0 0.0
    %619 = vmatprep.subr.mxu0 0.0
    %620 = vmatpush1.msra.mxu0 0.0
    %621 = vmatprep.subr.mxu0 0.0
    %622 = vmatpush1.msra.mxu0 0.0
    %623 = vmatprep.subr.mxu0 0.0
    %624 = vmatpush1.msra.mxu0 0.0
    %625 = vmatprep.subr.mxu0 0.0
    %626 = vmatpush1.msra.mxu0 0.0
    %627 = vmatprep.subr.mxu0 0.0
    %628 = vmatpush1.msra.mxu0 0.0
    %629 = vmatprep.subr.mxu0 0.0
    %630 = vmatpush1.msra.mxu0 0.0
    %631 = vmatprep.subr.mxu0 0.0
    %632 = vmatpush1.msra.mxu0 0.0
    %633 = vmatprep.subr.mxu0 %v593
    %634 = vmatpush1.msra.mxu0 %v592
    %635 = vmatprep.subr.mxu0 %v589
    %636 = vmatpush1.msra.mxu0 %v588
    %637 = vmatprep.subr.mxu0 0.0
    %638 = vmatpush2.msra.mxu0 0.0
    %639 = vmatprep.subr.mxu0 0.0
    %640 = vmatpush2.msra.mxu0 0.0
    %641 = vmatprep.subr.mxu0 0.0
    %642 = vmatpush2.msra.mxu0 0.0
    %643 = vmatprep.subr.mxu0 0.0
    %644 = vmatpush2.msra.mxu0 0.0
    %645 = vmatprep.subr.mxu0 0.0
    %646 = vmatpush2.msra.mxu0 0.0
    %647 = vmatprep.subr.mxu0 0.0
    %648 = vmatpush2.msra.mxu0 0.0
    %649 = vmatprep.subr.mxu0 0.0
    %650 = vmatpush2.msra.mxu0 0.0
    %651 = vmatprep.subr.mxu0 0.0
    %652 = vmatpush2.msra.mxu0 0.0
    %653 = vmatprep.subr.mxu0 0.0
    %654 = vmatpush2.msra.mxu0 0.0
    %655 = vmatprep.subr.mxu0 0.0
    %656 = vmatpush2.msra.mxu0 0.0
    %657 = vmatprep.subr.mxu0 0.0
    %658 = vmatpush2.msra.mxu0 0.0
    %659 = vmatprep.subr.mxu0 0.0
    %660 = vmatpush2.msra.mxu0 0.0
    %661 = vmatprep.subr.mxu0 0.0
    %662 = vmatpush2.msra.mxu0 0.0
    %663 = vmatprep.subr.mxu0 0.0
    %664 = vmatpush2.msra.mxu0 0.0
    %665 = vmatprep.subr.mxu0 0.0
    %666 = vmatpush2.msra.mxu0 0.0
    %667 = vmatprep.subr.mxu0 0.0
    %668 = vmatpush2.msra.mxu0 0.0
    %669 = vmatprep.mubr.f32.mxu0 0.0
    %670 = vmatmul.mubr.f32.gmra.mxu0 %v600
    %v671 = vpop.f32.mrf.mxu0
    %v672 = vadd.f32 0.0, %v671
    %v673 = vpop.f32.mrf.mxu0
    %v674 = vadd.f32 0.0, %v673
    %675 = vmatprep.mubr.f32.mxu0 0.0
    %676 = vmatmul.mubr.f32.gmra.mxu0 %v603
    %v677 = vpop.f32.mrf.mxu0
    %v678 = vadd.f32 0.0, %v677
    %v679 = vpop.f32.mrf.mxu0
    %v680 = vadd.f32 0.0, %v679
    %681 = vdwg.mxu0
    %682 = vmatprep.subr.mxu0 0.0
    %683 = vmatpush1.msra.mxu0 0.0
    %684 = vmatprep.subr.mxu0 0.0
    %685 = vmatpush1.msra.mxu0 0.0
    %686 = vmatprep.subr.mxu0 0.0
    %687 = vmatpush1.msra.mxu0 0.0
    %688 = vmatprep.subr.mxu0 0.0
    %689 = vmatpush1.msra.mxu0 0.0
    %690 = vmatprep.subr.mxu0 0.0
    %691 = vmatpush1.msra.mxu0 0.0
    %692 = vmatprep.subr.mxu0 0.0
    %693 = vmatpush1.msra.mxu0 0.0
    %694 = vmatprep.subr.mxu0 0.0
    %695 = vmatpush1.msra.mxu0 0.0
    %696 = vmatprep.subr.mxu0 0.0
    %697 = vmatpush1.msra.mxu0 0.0
    %698 = vmatprep.subr.mxu0 0.0
    %699 = vmatpush1.msra.mxu0 0.0
    %700 = vmatprep.subr.mxu0 0.0
    %701 = vmatpush1.msra.mxu0 0.0
    %702 = vmatprep.subr.mxu0 0.0
    %703 = vmatpush1.msra.mxu0 0.0
    %704 = vmatprep.subr.mxu0 0.0
    %705 = vmatpush1.msra.mxu0 0.0
    %706 = vmatprep.subr.mxu0 0.0
    %707 = vmatpush1.msra.mxu0 0.0
    %708 = vmatprep.subr.mxu0 0.0
    %709 = vmatpush1.msra.mxu0 0.0
    %710 = vmatprep.subr.mxu0 %v595
    %711 = vmatpush1.msra.mxu0 %v594
    %712 = vmatprep.subr.mxu0 %v591
    %713 = vmatpush1.msra.mxu0 %v590
    %714 = vmatprep.subr.mxu0 0.0
    %715 = vmatpush2.msra.mxu0 0.0
    %716 = vmatprep.subr.mxu0 0.0
    %717 = vmatpush2.msra.mxu0 0.0
    %718 = vmatprep.subr.mxu0 0.0
    %719 = vmatpush2.msra.mxu0 0.0
    %720 = vmatprep.subr.mxu0 0.0
    %721 = vmatpush2.msra.mxu0 0.0
    %722 = vmatprep.subr.mxu0 0.0
    %723 = vmatpush2.msra.mxu0 0.0
    %724 = vmatprep.subr.mxu0 0.0
    %725 = vmatpush2.msra.mxu0 0.0
    %726 = vmatprep.subr.mxu0 0.0
    %727 = vmatpush2.msra.mxu0 0.0
    %728 = vmatprep.subr.mxu0 0.0
    %729 = vmatpush2.msra.mxu0 0.0
    %730 = vmatprep.subr.mxu0 0.0
    %731 = vmatpush2.msra.mxu0 0.0
    %732 = vmatprep.subr.mxu0 0.0
    %733 = vmatpush2.msra.mxu0 0.0
    %734 = vmatprep.subr.mxu0 0.0
    %735 = vmatpush2.msra.mxu0 0.0
    %736 = vmatprep.subr.mxu0 0.0
    %737 = vmatpush2.msra.mxu0 0.0
    %738 = vmatprep.subr.mxu0 0.0
    %739 = vmatpush2.msra.mxu0 0.0
    %740 = vmatprep.subr.mxu0 0.0
    %741 = vmatpush2.msra.mxu0 0.0
    %742 = vmatprep.subr.mxu0 0.0
    %743 = vmatpush2.msra.mxu0 0.0
    %744 = vmatprep.subr.mxu0 0.0
    %745 = vmatpush2.msra.mxu0 0.0
    %746 = vmatprep.mubr.f32.mxu0 0.0
    %747 = vmatmul.mubr.f32.gmra.mxu0 %v600
    %v748 = vpop.f32.mrf.mxu0
    %v749 = vadd.f32 0.0, %v748
    %v750 = vpop.f32.mrf.mxu0
    %v751 = vadd.f32 0.0, %v750
    %752 = vmatprep.mubr.f32.mxu0 0.0
    %753 = vmatmul.mubr.f32.gmra.mxu0 %v603
    %v754 = vpop.f32.mrf.mxu0
    %v755 = vadd.f32 0.0, %v754
    %v756 = vpop.f32.mrf.mxu0
    %v757 = vadd.f32 0.0, %v756
    %758 = vdwg.mxu0
    %v759 = vadd.f32 %v672, %v674
    %v760 = vadd.f32 %v759, %v749
    %v761 = vadd.f32 %v760, %v751
    %762 = vadd.xlane.f32.xlu0 %v761
    %v763 = vpop.xlane.xlu0 %762
    %v764 = vadd.f32 %v678, %v680
    %v765 = vadd.f32 %v764, %v755
    %v766 = vadd.f32 %v765, %v757
    %767 = vadd.xlane.f32.xlu0 %v766
    %v768 = vpop.xlane.xlu0 %767
    %v769 = vmul.f32 %v763, 0.001953125
    %v770 = vmul.f32 %v768, 0.001953125
    %v771 = vmul.f32 %v672, %v672
    %v772 = vmul.f32 %v674, %v674
    %v773 = vmul.f32 %v749, %v749
    %v774 = vmul.f32 %v751, %v751
    %v775 = vmul.f32 %v678, %v678
    %v776 = vmul.f32 %v680, %v680
    %v777 = vmul.f32 %v755, %v755
    %v778 = vmul.f32 %v757, %v757
    %v779 = vadd.f32 %v771, %v772
    %v780 = vadd.f32 %v779, %v773
    %v781 = vadd.f32 %v780, %v774
    %782 = vadd.xlane.f32.xlu0 %v781
    %v783 = vpop.xlane.xlu0 %782
    %v784 = vadd.f32 %v775, %v776
    %v785 = vadd.f32 %v784, %v777
    %v786 = vadd.f32 %v785, %v778
    %787 = vadd.xlane.f32.xlu0 %v786
    %v788 = vpop.xlane.xlu0 %787
    %v789 = vmul.f32 %v783, 0.001953125
    %v790 = vmul.f32 %v788, 0.001953125
    %v791 = vmul.f32 %v769, %v769
    %v792 = vmul.f32 %v770, %v770
    %v793 = vsub.f32 %v789, %v791
    %v794 = vsub.f32 %v790, %v792
    %v795 = vld [vmem:[%s3] sm:$0xff]
    %v796 = vld [vmem:[%s3 + $0x8] sm:$0xff]
    %v797 = vadd.f32 %v793, 1e-05
    %v798 = vadd.f32 %v794, 1e-05
    %v799 = vrsqrt.pop %v797
    %v800 = vrsqrt.pop %v798
    %v801 = vmul.f32 %v795, %v799
    %v802 = vmul.f32 %v796, %v800
    %v803 = vld [vmem:[%s4] sm:$0xff]
    %v804 = vld [vmem:[%s4 + $0x8] sm:$0xff]
    %v805 = vmul.f32 %v769, %v801
    %v806 = vmul.f32 %v770, %v802
    %v807 = vsub.f32 %v803, %v805
    %v808 = vsub.f32 %v804, %v806
    %810 = vset.pattern.permute.xlu0 0
    %811 = vperm.xlu0 %810, %v801
    %v812 = vpop.permute.xlu0 %811
    %815 = vset.pattern.permute.xlu0 0
    %816 = vperm.xlu0 %815, %v802
    %v817 = vpop.permute.xlu0 %816
    %v819 = vmul.f32 %v672, %v812
    %v820 = vmul.f32 %v674, %v812
    %v821 = vmul.f32 %v749, %v812
    %v822 = vmul.f32 %v751, %v812
    %v823 = vmul.f32 %v678, %v817
    %v824 = vmul.f32 %v680, %v817
    %v825 = vmul.f32 %v755, %v817
    %v826 = vmul.f32 %v757, %v817
    %828 = vset.pattern.permute.xlu0 0
    %829 = vperm.xlu0 %828, %v807
    %v830 = vpop.permute.xlu0 %829
    %833 = vset.pattern.permute.xlu0 0
    %834 = vperm.xlu0 %833, %v808
    %v835 = vpop.permute.xlu0 %834
    %v837 = vadd.f32 %v819, %v830
    %v838 = vadd.f32 %v820, %v830
    %v839 = vadd.f32 %v821, %v830
    %v840 = vadd.f32 %v822, %v830
    %v841 = vadd.f32 %v823, %v835
    %v842 = vadd.f32 %v824, %v835
    %v843 = vadd.f32 %v825, %v835
    %v844 = vadd.f32 %v826, %v835
    %v845 = vmax.f32 %v837, 0.0
    %v846 = vmax.f32 %v838, 0.0
    %v847 = vmax.f32 %v839, 0.0
    %v848 = vmax.f32 %v840, 0.0
    %v849 = vmax.f32 %v841, 0.0
    %v850 = vmax.f32 %v842, 0.0
    %v851 = vmax.f32 %v843, 0.0
    %v852 = vmax.f32 %v844, 0.0
    %853 = vst [vmem:[#allocation5] sm:$0xff] %v845
    %854 = vst [vmem:[#allocation5 + $0x8] sm:$0xff] %v846
    %855 = vst [vmem:[#allocation5 + $0x10] sm:$0xff] %v849
    %856 = vst [vmem:[#allocation5 + $0x18] sm:$0xff] %v850
    %857 = vst [vmem:[#allocation5 + $0x20] sm:$0xff] %v847
    %858 = vst [vmem:[#allocation5 + $0x28] sm:$0xff] %v848
    %859 = vst [vmem:[#allocation5 + $0x30] sm:$0xff] %v851
    %860 = vst [vmem:[#allocation5 + $0x38] sm:$0xff] %v852
    // Predicated region
    $region26: #{tpu_custom_call.1} parent=1 // pred_check
      _
    $region27: #{tpu_custom_call.1} parent=1 // pred_check_branch
      %862 = sbr.rel (0) target = $region29
    $region28: #{tpu_custom_call.1} parent=1 // pred_region
      %s864 = ssub.s32 1024, 1024
      %865 = vsyncadd [#allocation4], %s864
      %s866 = sshll.u32 [#allocation5], 4
      %s867 = int_to_ptr.vmem [resolvable:$true] %s866
      %872 = dma.vmem_to_hbm [thread:$0]  %s867, 1024, %s5, [#allocation4], 256, 256, 16
    $region29: #{tpu_custom_call.1} parent=1 // pred_fallthru
      _
    // Predicated region
    $region30: #{tpu_custom_call.1} parent=1 // pred_check
      _
    $region31: #{tpu_custom_call.1} parent=1 // pred_check_branch
      %874 = sbr.rel (0) target = $region33
    $region32: #{tpu_custom_call.1} parent=1 // pred_region
      %875 = dma.done [#allocation4], 1024
    $region33: #{tpu_custom_call.1} parent=1 // pred_fallthru
      _
    %876 = vsyncpa [#allocation3], 1
    %877 = vsyncpa [#allocation4], 1

</llo_original>
